<compile_context>
chip_gen: v6e
topology: v6e:2x2x1
jax: 0.10.0
libtpu: 0.0.40
codegen_flags: <defaults>
</compile_context>

<pallas_src>
import functools

import jax
import jax.numpy as jnp
from jax.experimental import pallas as pl
from jax.experimental.pallas import tpu as pltpu

HIDDEN = 128  # fixed by the module definition (nn.Linear(input_size, 128))


def _round_up(x, m):
    return (x + m - 1) // m * m


def _pick_batch_tile(batch):
    """Multiple-of-8 tile, capped at 512 rows, >=2 grid steps when possible."""
    b8 = _round_up(max(batch, 8), 8)
    tile = min(512, b8)
    if b8 >= 16:
        # Keep at least two grid steps so v7x can shard the batch across its
        # two TensorCores and BlockSpec pipelining has something to overlap.
        half = max(8, (b8 // 2) // 8 * 8)
        tile = min(tile, half)
    return tile


def _make_kernel(use_bf16_matmul):
    def mlp_kernel(x_ref, w1_ref, b1_ref, w2_ref, b2_ref, o_ref):
        # x_ref:  (TB, D_in)    w1_ref: (D_in, 128)   b1_ref: (1, 128)
        # w2_ref: (128, C_pad)  b2_ref: (1, C_pad)    o_ref:  (TB, C_pad)
        x = x_ref[...]
        w1 = w1_ref[...]
        w2 = w2_ref[...]
        if use_bf16_matmul:
            x = x.astype(jnp.bfloat16)
            w1 = w1.astype(jnp.bfloat16)
            w2 = w2.astype(jnp.bfloat16)
        # fc1 + bias + ReLU (f32 accumulation and elementwise math).
        h = jnp.dot(x, w1, preferred_element_type=jnp.float32) + b1_ref[...]
        h = jnp.maximum(h, 0.0)
        if use_bf16_matmul:
            h = h.astype(jnp.bfloat16)
        # fc2 + bias.
        y = jnp.dot(h, w2, preferred_element_type=jnp.float32) + b2_ref[...]
        o_ref[...] = y.astype(o_ref.dtype)

    return mlp_kernel


@functools.partial(jax.jit, static_argnames=("batch_tile", "use_bf16_matmul"))
def simple_classifier_forward(x, w1, b1, w2, b2, *, batch_tile=None,
                              use_bf16_matmul=False):
    B, D_in = x.shape
    C = w2.shape[1]

    # ---- tiling / padding decisions -------------------------------------
    if batch_tile is None:
        batch_tile = _pick_batch_tile(B)
    batch_tile = max(8, (batch_tile // 8) * 8)          # (8,128) sublane rule
    B_pad = _round_up(B, batch_tile)                    # ragged batch -> pad
    C_pad = _round_up(max(C, 128), 128)                 # lane-dense output

    x_p = x if B_pad == B else jnp.pad(x, ((0, B_pad - B), (0, 0)))
    w2_p = w2 if C_pad == C else jnp.pad(w2, ((0, 0), (0, C_pad - C)))
    b2_p = b2 if C_pad == C else jnp.pad(b2, ((0, C_pad - C),))
    b1_2d = b1.reshape(1, HIDDEN)
    b2_2d = b2_p.reshape(1, C_pad)

    grid = (B_pad // batch_tile,)

    # ---- VMEM budget (double-buffered x/out tiles + weights + h) ---------
    f32 = 4
    needed = (2 * batch_tile * D_in * f32          # x tile, double buffered
              + 2 * batch_tile * C_pad * f32       # out tile, double buffered
              + 2 * (D_in * HIDDEN + HIDDEN * C_pad + HIDDEN + C_pad) * f32
              + batch_tile * HIDDEN * f32)         # intermediate h
    vmem_limit = min(max(int(needed * 1.5) + (4 << 20), 32 << 20), 64 << 20)
    # TODO(synk): for very large input_size (>~16K) add a K-tiling grid axis
    # with an f32 accumulator so VMEM stays bounded independent of D_in.

    cost = pl.CostEstimate(
        flops=2 * B_pad * (D_in * HIDDEN + HIDDEN * C_pad),
        transcendentals=0,
        bytes_accessed=(B_pad * D_in + D_in * HIDDEN + HIDDEN * C_pad
                        + HIDDEN + C_pad + B_pad * C_pad) * f32,
    )

    out = pl.pallas_call(
        _make_kernel(use_bf16_matmul),
        out_shape=jax.ShapeDtypeStruct((B_pad, C_pad), jnp.float32),
        grid_spec=pltpu.PrefetchScalarGridSpec(
            num_scalar_prefetch=0,
            grid=grid,
            in_specs=[
                pl.BlockSpec((batch_tile, D_in), lambda i: (i, 0)),
                pl.BlockSpec((D_in, HIDDEN), lambda i: (0, 0)),
                pl.BlockSpec((1, HIDDEN), lambda i: (0, 0)),
                pl.BlockSpec((HIDDEN, C_pad), lambda i: (0, 0)),
                pl.BlockSpec((1, C_pad), lambda i: (0, 0)),
            ],
            out_specs=pl.BlockSpec((batch_tile, C_pad), lambda i: (i, 0)),
        ),
        compiler_params=pltpu.CompilerParams(
            dimension_semantics=("parallel",),
            vmem_limit_bytes=vmem_limit,
        ),
        cost_estimate=cost,
    )(x_p, w1, b1_2d, w2, b2_2d) if C_pad == C and B_pad == B else \
        pl.pallas_call(
            _make_kernel(use_bf16_matmul),
            out_shape=jax.ShapeDtypeStruct((B_pad, C_pad), jnp.float32),
            grid_spec=pltpu.PrefetchScalarGridSpec(
                num_scalar_prefetch=0,
                grid=grid,
                in_specs=[
                    pl.BlockSpec((batch_tile, D_in), lambda i: (i, 0)),
                    pl.BlockSpec((D_in, HIDDEN), lambda i: (0, 0)),
                    pl.BlockSpec((1, HIDDEN), lambda i: (0, 0)),
                    pl.BlockSpec((HIDDEN, C_pad), lambda i: (0, 0)),
                    pl.BlockSpec((1, C_pad), lambda i: (0, 0)),
                ],
                out_specs=pl.BlockSpec((batch_tile, C_pad), lambda i: (i, 0)),
            ),
            compiler_params=pltpu.CompilerParams(
                dimension_semantics=("parallel",),
                vmem_limit_bytes=vmem_limit,
            ),
            cost_estimate=cost,
        )(x_p, w1, b1_2d, w2_p, b2_2d)

    # Slice the padding back off (rows from batch padding, cols from lane pad).
    return out[:B, :C]


def init_params(key, input_size, num_classes):
    # Deterministic init mimicking PyTorch nn.Linear default (+/- 1/sqrt(fan_in)).
    k1, k2, k3, k4 = jax.random.split(key, 4)
    bound1 = 1.0 / jnp.sqrt(input_size)
    bound2 = 1.0 / jnp.sqrt(HIDDEN)
    w1 = jax.random.uniform(k1, (input_size, HIDDEN), jnp.float32, -bound1, bound1)
    b1 = jax.random.uniform(k2, (HIDDEN,), jnp.float32, -bound1, bound1)
    w2 = jax.random.uniform(k3, (HIDDEN, num_classes), jnp.float32, -bound2, bound2)
    b2 = jax.random.uniform(k4, (num_classes,), jnp.float32, -bound2, bound2)
    return w1, b1, w2, b2


def _reference(x, w1, b1, w2, b2):
    return jnp.maximum(x @ w1 + b1, 0.0) @ w2 + b2


if __name__ == "__main__":
    key = jax.random.PRNGKey(0)
    kx1, kx2, kp = jax.random.split(key, 3)

    input_size = 32
    num_classes = 10
    w1, b1, w2, b2 = init_params(kp, input_size, num_classes)

    # Case 1: small batch (single grid step).
    x_small = jax.random.normal(kx1, (8, input_size), jnp.float32)
    out_small = jax.block_until_ready(
        simple_classifier_forward(x_small, w1, b1, w2, b2))
    ref_small = _reference(x_small, w1, b1, w2, b2)
    assert out_small.shape == (8, num_classes)
    assert jnp.allclose(out_small, ref_small, atol=1e-5, rtol=1e-5)

    # Case 2: ragged batch (exercises batch padding + multi-step grid,
    # so the "parallel" axis can use both TensorCores on v7x).
    x_ragged = jax.random.normal(kx2, (20, input_size), jnp.float32)
    out_ragged = jax.block_until_ready(
        simple_classifier_forward(x_ragged, w1, b1, w2, b2))
    ref_ragged = _reference(x_ragged, w1, b1, w2, b2)
    assert out_ragged.shape == (20, num_classes)
    assert jnp.allclose(out_ragged, ref_ragged, atol=1e-5, rtol=1e-5)

    print("KERNEL_OK")
</pallas_src>

<mosaic_0001>
module attributes {stable_mosaic.version = 11 : i64} {
  func.func @mlp_kernel(%arg0: i32, %arg1: memref<8x32xf32, #tpu.memory_space<vmem>>, %arg2: memref<32x128xf32, #tpu.memory_space<vmem>>, %arg3: memref<1x128xf32, #tpu.memory_space<vmem>>, %arg4: memref<128x128xf32, #tpu.memory_space<vmem>>, %arg5: memref<1x128xf32, #tpu.memory_space<vmem>>, %arg6: memref<8x128xf32, #tpu.memory_space<vmem>>) attributes {dimension_semantics = [#tpu.dimension_semantics<parallel>], iteration_bounds = array<i64: 1>, scalar_prefetch = 0 : i64, scratch_operands = 0 : i64, tpu.core_type = #tpu.core_type<tc>, window_params = [{transform_indices = @transform_0, window_bounds = array<i64: 8, 32>}, {pipeline_mode = #tpu.pipeline_mode<synchronous>, transform_indices = @transform_1, window_bounds = array<i64: 32, 128>}, {pipeline_mode = #tpu.pipeline_mode<synchronous>, transform_indices = @transform_2, window_bounds = array<i64: 1, 128>}, {pipeline_mode = #tpu.pipeline_mode<synchronous>, transform_indices = @transform_3, window_bounds = array<i64: 128, 128>}, {pipeline_mode = #tpu.pipeline_mode<synchronous>, transform_indices = @transform_4, window_bounds = array<i64: 1, 128>}, {transform_indices = @transform_5, window_bounds = array<i64: 8, 128>}]} {
    %c0 = arith.constant 0 : index
    %c0_0 = arith.constant 0 : index
    %0 = vector.load %arg1[%c0, %c0_0] : memref<8x32xf32, #tpu.memory_space<vmem>>, vector<8x32xf32>
    %c0_1 = arith.constant 0 : index
    %c0_2 = arith.constant 0 : index
    %1 = vector.load %arg2[%c0_1, %c0_2] : memref<32x128xf32, #tpu.memory_space<vmem>>, vector<32x128xf32>
    %c0_3 = arith.constant 0 : index
    %c0_4 = arith.constant 0 : index
    %2 = vector.load %arg4[%c0_3, %c0_4] : memref<128x128xf32, #tpu.memory_space<vmem>>, vector<128x128xf32>
    %cst = arith.constant dense<0.000000e+00> : vector<8x128xf32>
    %3 = tpu.matmul %0, %1, %cst {dimension_numbers = #tpu.dot_dimension_numbers<[1], [0], [0], [1], [0, 0, 1, 1], [], []>} : vector<8x32xf32>, vector<32x128xf32>, vector<8x128xf32> -> vector<8x128xf32>
    %c0_5 = arith.constant 0 : index
    %c0_6 = arith.constant 0 : index
    %4 = vector.load %arg3[%c0_5, %c0_6] : memref<1x128xf32, #tpu.memory_space<vmem>>, vector<1x128xf32>
    %5 = vector.broadcast %4 : vector<1x128xf32> to vector<8x128xf32>
    %6 = arith.addf %3, %5 : vector<8x128xf32>
    %cst_7 = arith.constant 0.000000e+00 : f32
    %7 = vector.broadcast %cst_7 : f32 to vector<8x128xf32>
    %8 = arith.maximumf %6, %7 : vector<8x128xf32>
    %cst_8 = arith.constant dense<0.000000e+00> : vector<8x128xf32>
    %9 = tpu.matmul %8, %2, %cst_8 {dimension_numbers = #tpu.dot_dimension_numbers<[1], [0], [0], [1], [0, 0, 1, 1], [], []>} : vector<8x128xf32>, vector<128x128xf32>, vector<8x128xf32> -> vector<8x128xf32>
    %c0_9 = arith.constant 0 : index
    %c0_10 = arith.constant 0 : index
    %10 = vector.load %arg5[%c0_9, %c0_10] : memref<1x128xf32, #tpu.memory_space<vmem>>, vector<1x128xf32>
    %11 = vector.broadcast %10 : vector<1x128xf32> to vector<8x128xf32>
    %12 = arith.addf %9, %11 : vector<8x128xf32>
    %c0_11 = arith.constant 0 : index
    %c0_12 = arith.constant 0 : index
    %13 = vector.load %arg6[%c0_11, %c0_12] : memref<8x128xf32, #tpu.memory_space<vmem>>, vector<8x128xf32>
    tpu.vector_store %arg6[%c0_11, %c0_12], %12 {strides = array<i32>} : memref<8x128xf32, #tpu.memory_space<vmem>>, vector<8x128xf32>,
    return
  }
  func.func @transform_0(%arg0: i32) -> (i32, i32) {
    %c0_i32 = arith.constant 0 : i32
    %c0_i32_0 = arith.constant 0 : i32
    return %arg0, %c0_i32 : i32, i32
  }
  func.func @transform_1(%arg0: i32) -> (i32, i32) {
    %c0_i32 = arith.constant 0 : i32
    %c0_i32_0 = arith.constant 0 : i32
    %c0_i32_1 = arith.constant 0 : i32
    return %c0_i32, %c0_i32_0 : i32, i32
  }
  func.func @transform_2(%arg0: i32) -> (i32, i32) {
    %c0_i32 = arith.constant 0 : i32
    %c0_i32_0 = arith.constant 0 : i32
    %c0_i32_1 = arith.constant 0 : i32
    return %c0_i32, %c0_i32_0 : i32, i32
  }
  func.func @transform_3(%arg0: i32) -> (i32, i32) {
    %c0_i32 = arith.constant 0 : i32
    %c0_i32_0 = arith.constant 0 : i32
    %c0_i32_1 = arith.constant 0 : i32
    return %c0_i32, %c0_i32_0 : i32, i32
  }
  func.func @transform_4(%arg0: i32) -> (i32, i32) {
    %c0_i32 = arith.constant 0 : i32
    %c0_i32_0 = arith.constant 0 : i32
    %c0_i32_1 = arith.constant 0 : i32
    return %c0_i32, %c0_i32_0 : i32, i32
  }
  func.func @transform_5(%arg0: i32) -> (i32, i32) {
    %c0_i32 = arith.constant 0 : i32
    %c0_i32_0 = arith.constant 0 : i32
    return %arg0, %c0_i32 : i32, i32
  }
}

</mosaic_0001>

<llo_original>
// kernel: simple_classifier_forward.1
$region0: #{simple_classifier_forward.1}
  #allocation0 [shape = 'u32[]', space=smem, size = 0x4, offset = 0x4, fixed_abs, tag = 'smem constant byte address 0x4 - core index']
  #allocation1 [shape = 'u32[144,128]{1,0:T(1,128)}', space=vmem, size = 0x12000, scoped, tag = 'internal scratch']
  %s0 = inlined_call_operand.vmem [shape: f32[8,32], index: 0, kind: input, shape index: {}]
  %s1 = inlined_call_operand.vmem [shape: f32[32,128], index: 1, kind: input, shape index: {}]
  %s2 = inlined_call_operand.vmem [shape: f32[1,128], index: 2, kind: input, shape index: {}]
  %s3 = inlined_call_operand.vmem [shape: f32[128,128], index: 3, kind: input, shape index: {}]
  %s4 = inlined_call_operand.vmem [shape: f32[1,128], index: 4, kind: input, shape index: {}]
  %s5 = inlined_call_operand.hbm [shape: f32[8,128], index: 5, kind: output, shape index: {}]
  %s6 = sld [smem:[#allocation0]]
  $region30: #{simple_classifier_forward.1} parent=0
    _
  %s8 = ssub.s32 1, %s6
  %s9 = scalar_select 0, %s8, %s6
  $region1: #{simple_classifier_forward.1} parent=0
    #allocation2 [shape = 'u8[4096]{0}', space=vmem, size = 0x1000, scoped, tag = 'output window, operand 0, single buffered']
    #allocation3 [shape = 's32[1]{0}', space=sflag, size = 0x4, scoped, tag = 'scoped memory for simple_classifier_forward.1']
    %10 = vsyncpa [#allocation3], 0
    // Predicated region
    $region2: #{simple_classifier_forward.1} parent=1 // pred_check
      _
    $region3: #{simple_classifier_forward.1} parent=1 // pred_check_branch
      %12 = sbr.rel (0) target = $region5
    $region4: #{simple_classifier_forward.1} parent=1 // pred_region
      _
    $region5: #{simple_classifier_forward.1} parent=1 // pred_fallthru
      _
    // Predicated region
    $region6: #{simple_classifier_forward.1} parent=1 // pred_check
      _
    $region7: #{simple_classifier_forward.1} parent=1 // pred_check_branch
      %14 = sbr.rel (0) target = $region9
    $region8: #{simple_classifier_forward.1} parent=1 // pred_region
      _
    $region9: #{simple_classifier_forward.1} parent=1 // pred_fallthru
      _
    // Predicated region
    $region10: #{simple_classifier_forward.1} parent=1 // pred_check
      _
    $region11: #{simple_classifier_forward.1} parent=1 // pred_check_branch
      %16 = sbr.rel (0) target = $region13
    $region12: #{simple_classifier_forward.1} parent=1 // pred_region
      _
    $region13: #{simple_classifier_forward.1} parent=1 // pred_fallthru
      _
    // Predicated region
    $region14: #{simple_classifier_forward.1} parent=1 // pred_check
      _
    $region15: #{simple_classifier_forward.1} parent=1 // pred_check_branch
      %18 = sbr.rel (0) target = $region17
    $region16: #{simple_classifier_forward.1} parent=1 // pred_region
      _
    $region17: #{simple_classifier_forward.1} parent=1 // pred_fallthru
      _
    // Predicated region
    $region18: #{simple_classifier_forward.1} parent=1 // pred_check
      _
    $region19: #{simple_classifier_forward.1} parent=1 // pred_check_branch
      %20 = sbr.rel (0) target = $region21
    $region20: #{simple_classifier_forward.1} parent=1 // pred_region
      _
    $region21: #{simple_classifier_forward.1} parent=1 // pred_fallthru
      _
    %v21 = vld [vmem:[%s0] sm:$0xff]
    %v22 = vld [vmem:[%s1] sm:$0xff]
    %v23 = vld [vmem:[%s1 + $0x8] sm:$0xff]
    %v24 = vld [vmem:[%s1 + $0x10] sm:$0xff]
    %v25 = vld [vmem:[%s1 + $0x18] sm:$0xff]
    %v26 = vld [vmem:[%s3] sm:$0xff]
    %v27 = vld [vmem:[%s3 + $0x8] sm:$0xff]
    %v28 = vld [vmem:[%s3 + $0x10] sm:$0xff]
    %v29 = vld [vmem:[%s3 + $0x18] sm:$0xff]
    %v30 = vld [vmem:[%s3 + $0x20] sm:$0xff]
    %v31 = vld [vmem:[%s3 + $0x28] sm:$0xff]
    %v32 = vld [vmem:[%s3 + $0x30] sm:$0xff]
    %v33 = vld [vmem:[%s3 + $0x38] sm:$0xff]
    %v34 = vld [vmem:[%s3 + $0x40] sm:$0xff]
    %v35 = vld [vmem:[%s3 + $0x48] sm:$0xff]
    %v36 = vld [vmem:[%s3 + $0x50] sm:$0xff]
    %v37 = vld [vmem:[%s3 + $0x58] sm:$0xff]
    %v38 = vld [vmem:[%s3 + $0x60] sm:$0xff]
    %v39 = vld [vmem:[%s3 + $0x68] sm:$0xff]
    %v40 = vld [vmem:[%s3 + $0x70] sm:$0xff]
    %v41 = vld [vmem:[%s3 + $0x78] sm:$0xff]
    %v42 = vld [vmem:[%s2] sm:$0x1]
    %v44 = vlaneseq
    %v45 = vshrl.u32 %v44, 7
    %v46 = vsub.s32 0, %v45
    %v47 = vrot.slane %v42, %v46
    %vm49 = vcmask 261120
    %v51 = vsel %vm49, %v21, 0
    %53 = vmatprep.subr.mxu0 0.0
    %54 = vmatpush1.msra.mxu0 0.0
    %55 = vmatprep.subr.mxu0 0.0
    %56 = vmatpush1.msra.mxu0 0.0
    %57 = vmatprep.subr.mxu0 0.0
    %58 = vmatpush1.msra.mxu0 0.0
    %59 = vmatprep.subr.mxu0 0.0
    %60 = vmatpush1.msra.mxu0 0.0
    %61 = vmatprep.subr.mxu0 0.0
    %62 = vmatpush1.msra.mxu0 0.0
    %63 = vmatprep.subr.mxu0 0.0
    %64 = vmatpush1.msra.mxu0 0.0
    %65 = vmatprep.subr.mxu0 0.0
    %66 = vmatpush1.msra.mxu0 0.0
    %67 = vmatprep.subr.mxu0 0.0
    %68 = vmatpush1.msra.mxu0 0.0
    %69 = vmatprep.subr.mxu0 0.0
    %70 = vmatpush1.msra.mxu0 0.0
    %71 = vmatprep.subr.mxu0 0.0
    %72 = vmatpush1.msra.mxu0 0.0
    %73 = vmatprep.subr.mxu0 0.0
    %74 = vmatpush1.msra.mxu0 0.0
    %75 = vmatprep.subr.mxu0 0.0
    %76 = vmatpush1.msra.mxu0 0.0
    %77 = vmatprep.subr.mxu0 0.0
    %78 = vmatpush1.msra.mxu0 %v25
    %79 = vmatprep.subr.mxu0 0.0
    %80 = vmatpush1.msra.mxu0 %v24
    %81 = vmatprep.subr.mxu0 0.0
    %82 = vmatpush1.msra.mxu0 %v23
    %83 = vmatprep.subr.mxu0 0.0
    %84 = vmatpush1.msra.mxu0 %v22
    %85 = vmatprep.subr.mxu0 0.0
    %86 = vmatpush2.msra.mxu0 0.0
    %87 = vmatprep.subr.mxu0 0.0
    %88 = vmatpush2.msra.mxu0 0.0
    %89 = vmatprep.subr.mxu0 0.0
    %90 = vmatpush2.msra.mxu0 0.0
    %91 = vmatprep.subr.mxu0 0.0
    %92 = vmatpush2.msra.mxu0 0.0
    %93 = vmatprep.subr.mxu0 0.0
    %94 = vmatpush2.msra.mxu0 0.0
    %95 = vmatprep.subr.mxu0 0.0
    %96 = vmatpush2.msra.mxu0 0.0
    %97 = vmatprep.subr.mxu0 0.0
    %98 = vmatpush2.msra.mxu0 0.0
    %99 = vmatprep.subr.mxu0 0.0
    %100 = vmatpush2.msra.mxu0 0.0
    %101 = vmatprep.subr.mxu0 0.0
    %102 = vmatpush2.msra.mxu0 0.0
    %103 = vmatprep.subr.mxu0 0.0
    %104 = vmatpush2.msra.mxu0 0.0
    %105 = vmatprep.subr.mxu0 0.0
    %106 = vmatpush2.msra.mxu0 0.0
    %107 = vmatprep.subr.mxu0 0.0
    %108 = vmatpush2.msra.mxu0 0.0
    %109 = vmatprep.subr.mxu0 0.0
    %110 = vmatpush2.msra.mxu0 0.0
    %111 = vmatprep.subr.mxu0 0.0
    %112 = vmatpush2.msra.mxu0 0.0
    %113 = vmatprep.subr.mxu0 0.0
    %114 = vmatpush2.msra.mxu0 0.0
    %115 = vmatprep.subr.mxu0 0.0
    %116 = vmatpush2.msra.mxu0 0.0
    %117 = vmatprep.mubr.f32.mxu0 0.0
    %118 = vmatmul.mubr.f32.gmra.mxu0 %v51
    %v119 = vpop.f32.mrf.mxu0
    %v120 = vadd.f32 %v47, %v119
    %v121 = vpop.f32.mrf.mxu0
    %122 = vdwg.mxu0
    %v123 = vmax.f32 %v120, 0.0
    %v124 = vld [vmem:[%s4] sm:$0x1]
    %v126 = vlaneseq
    %v127 = vshrl.u32 %v126, 7
    %v128 = vsub.s32 0, %v127
    %v129 = vrot.slane %v124, %v128
    %131 = vmatprep.subr.mxu0 0.0
    %132 = vmatpush1.msra.mxu0 %v41
    %133 = vmatprep.subr.mxu0 0.0
    %134 = vmatpush1.msra.mxu0 %v40
    %135 = vmatprep.subr.mxu0 0.0
    %136 = vmatpush1.msra.mxu0 %v39
    %137 = vmatprep.subr.mxu0 0.0
    %138 = vmatpush1.msra.mxu0 %v38
    %139 = vmatprep.subr.mxu0 0.0
    %140 = vmatpush1.msra.mxu0 %v37
    %141 = vmatprep.subr.mxu0 0.0
    %142 = vmatpush1.msra.mxu0 %v36
    %143 = vmatprep.subr.mxu0 0.0
    %144 = vmatpush1.msra.mxu0 %v35
    %145 = vmatprep.subr.mxu0 0.0
    %146 = vmatpush1.msra.mxu0 %v34
    %147 = vmatprep.subr.mxu0 0.0
    %148 = vmatpush1.msra.mxu0 %v33
    %149 = vmatprep.subr.mxu0 0.0
    %150 = vmatpush1.msra.mxu0 %v32
    %151 = vmatprep.subr.mxu0 0.0
    %152 = vmatpush1.msra.mxu0 %v31
    %153 = vmatprep.subr.mxu0 0.0
    %154 = vmatpush1.msra.mxu0 %v30
    %155 = vmatprep.subr.mxu0 0.0
    %156 = vmatpush1.msra.mxu0 %v29
    %157 = vmatprep.subr.mxu0 0.0
    %158 = vmatpush1.msra.mxu0 %v28
    %159 = vmatprep.subr.mxu0 0.0
    %160 = vmatpush1.msra.mxu0 %v27
    %161 = vmatprep.subr.mxu0 0.0
    %162 = vmatpush1.msra.mxu0 %v26
    %163 = vmatprep.subr.mxu0 0.0
    %164 = vmatpush2.msra.mxu0 0.0
    %165 = vmatprep.subr.mxu0 0.0
    %166 = vmatpush2.msra.mxu0 0.0
    %167 = vmatprep.subr.mxu0 0.0
    %168 = vmatpush2.msra.mxu0 0.0
    %169 = vmatprep.subr.mxu0 0.0
    %170 = vmatpush2.msra.mxu0 0.0
    %171 = vmatprep.subr.mxu0 0.0
    %172 = vmatpush2.msra.mxu0 0.0
    %173 = vmatprep.subr.mxu0 0.0
    %174 = vmatpush2.msra.mxu0 0.0
    %175 = vmatprep.subr.mxu0 0.0
    %176 = vmatpush2.msra.mxu0 0.0
    %177 = vmatprep.subr.mxu0 0.0
    %178 = vmatpush2.msra.mxu0 0.0
    %179 = vmatprep.subr.mxu0 0.0
    %180 = vmatpush2.msra.mxu0 0.0
    %181 = vmatprep.subr.mxu0 0.0
    %182 = vmatpush2.msra.mxu0 0.0
    %183 = vmatprep.subr.mxu0 0.0
    %184 = vmatpush2.msra.mxu0 0.0
    %185 = vmatprep.subr.mxu0 0.0
    %186 = vmatpush2.msra.mxu0 0.0
    %187 = vmatprep.subr.mxu0 0.0
    %188 = vmatpush2.msra.mxu0 0.0
    %189 = vmatprep.subr.mxu0 0.0
    %190 = vmatpush2.msra.mxu0 0.0
    %191 = vmatprep.subr.mxu0 0.0
    %192 = vmatpush2.msra.mxu0 0.0
    %193 = vmatprep.subr.mxu0 0.0
    %194 = vmatpush2.msra.mxu0 0.0
    %195 = vmatprep.mubr.f32.mxu0 0.0
    %196 = vmatmul.mubr.f32.gmra.mxu0 %v123
    %v197 = vpop.f32.mrf.mxu0
    %v198 = vadd.f32 %v129, %v197
    %v199 = vpop.f32.mrf.mxu0
    %200 = vdwg.mxu0
    %201 = vst [vmem:[#allocation2] sm:$0xff] %v198
    // Predicated region
    $region22: #{simple_classifier_forward.1} parent=1 // pred_check
      _
    $region23: #{simple_classifier_forward.1} parent=1 // pred_check_branch
      %203 = sbr.rel (0) target = $region25
    $region24: #{simple_classifier_forward.1} parent=1 // pred_region
      %s205 = ssub.s32 128, 128
      %206 = vsyncadd [#allocation3], %s205
      %s208 = sshll.u32 [#allocation2], 4
      %s209 = int_to_ptr.vmem [resolvable:$true] %s208
      %211 = dma.vmem_to_hbm [thread:$0]  %s209, 128, %s5, [#allocation3]
    $region25: #{simple_classifier_forward.1} parent=1 // pred_fallthru
      _
    // Predicated region
    $region26: #{simple_classifier_forward.1} parent=1 // pred_check
      _
    $region27: #{simple_classifier_forward.1} parent=1 // pred_check_branch
      %213 = sbr.rel (0) target = $region29
    $region28: #{simple_classifier_forward.1} parent=1 // pred_region
      %214 = dma.done [#allocation3], 128
    $region29: #{simple_classifier_forward.1} parent=1 // pred_fallthru
      _
    %215 = vsyncpa [#allocation3], 1

</llo_original>
